<compile_context>
chip_gen: v5e
topology: v5e:2x2
jax: 0.10.0
libtpu: 0.0.40
codegen_flags: <defaults>
</compile_context>

<pallas_src>
import jax
import jax.numpy as jnp
from jax.experimental import pallas as pl
from jax.experimental.pallas import tpu as pltpu


def _round_up(x: int, m: int) -> int:
    return (x + m - 1) // m * m


def _make_kernel(n_valid: int, tn: int, c: int, n_pad: int, pos_weight: float):
    eps = 1e-08
    inv_smooth = 1.0 / (1.0 + eps * c)   # compile-time constant

    def kernel(logit_ref, y_ref, out_ref):
        logit = logit_ref[...].astype(jnp.float32)
        y = y_ref[...].astype(jnp.float32)

        # y / sum(y, dim=1): one exact reciprocal per row, broadcast-multiply.
        y_sum = jnp.sum(y, axis=1, keepdims=True)            # (TN, 1)
        y_norm = y * (1.0 / y_sum)

        # Numerically-stable softmax, again with a single per-row reciprocal.
        m = jnp.max(logit, axis=1, keepdims=True)             # (TN, 1)
        e = jnp.exp(logit - m)
        inv_den = 1.0 / jnp.sum(e, axis=1, keepdims=True)     # (TN, 1)

        # prob = (softmax + eps) / (1 + eps*C)  -> reciprocal folded into const.
        prob = (e * inv_den + eps) * inv_smooth

        # L = -(pos_weight * y * log(prob) + (1 - y) * log(1 - prob))
        loss = -(pos_weight * y_norm * jnp.log(prob)
                 + (1.0 - y_norm) * jnp.log(1.0 - prob))

        if n_pad != n_valid:
            # Static branch: only emit the row mask when rows were padded.
            row = (pl.program_id(0) * tn
                   + jax.lax.broadcasted_iota(jnp.int32, (tn, c), 0))
            loss = jnp.where(row < n_valid, loss, 0.0)

        # Per-column partial sums for this tile -> this tile's output slot.
        out_ref[...] = jnp.sum(loss, axis=0, keepdims=True).reshape(1, 1, c)

    return kernel


def make_softmax_loss(pos_weight: float = 1.0):
    """Returns a callable (logit, y) -> scalar loss, matching SoftMaxLoss.forward."""

    def apply(logit, y):
        n, c = logit.shape

        # --- tile sizing (2 f32 inputs x 2 pipeline buffers per tile) ------
        budget = 8 * 1024 * 1024                     # conservative on all gens
        bytes_per_row = 2 * 2 * c * 4
        tn_cap = max(8, (budget // bytes_per_row) // 8 * 8)
        tn = int(min(_round_up(n, 8), tn_cap, 1024))
        n_pad = _round_up(n, tn)
        num_tiles = n_pad // tn

        if n_pad != n:
            pad = n_pad - n
            logit = jnp.pad(logit, ((0, pad), (0, 0)))
            # Pad targets with ones so padded rows have y_sum != 0 (they are
            # masked out of the loss inside the kernel anyway).
            y = jnp.pad(y, ((0, pad), (0, 0)), constant_values=1.0)

        kernel = _make_kernel(n, tn, c, n_pad, float(pos_weight))

        partials = pl.pallas_call(
            kernel,
            out_shape=jax.ShapeDtypeStruct((num_tiles, 1, c), jnp.float32),
            grid=(num_tiles,),
            in_specs=[
                pl.BlockSpec((tn, c), lambda i: (i, 0)),
                pl.BlockSpec((tn, c), lambda i: (i, 0)),
            ],
            out_specs=pl.BlockSpec((1, 1, c), lambda i: (i, 0, 0)),
            compiler_params=pltpu.CompilerParams(
                dimension_semantics=("parallel",),
                vmem_limit_bytes=32 * 1024 * 1024,
            ),
        )(logit, y)

        # Mean over the original N*C elements; scale is a compile-time const.
        return jnp.sum(partials) * (1.0 / (n * c))

    return apply


def softmax_loss_ref(logit, y, pos_weight: float = 1.0):
    """Pure-JAX reference mirroring the PyTorch forward exactly."""
    y = y / jnp.sum(y, axis=1, keepdims=True)
    eps = 1e-08
    prob = jax.nn.softmax(logit, axis=1)
    prob = (prob + eps) / (1.0 + eps * logit.shape[1])
    total_loss = -(pos_weight * y * jnp.log(prob) + (1.0 - y) * jnp.log(1.0 - prob))
    return jnp.mean(total_loss)


if __name__ == "__main__":
    key = jax.random.PRNGKey(0)
    k1, k2 = jax.random.split(key)

    N, C = 8, 32
    pos_weight = 1.0

    logit = jax.random.normal(k1, (N, C), dtype=jnp.float32)
    # multi-hot targets in {0,1}; guarantee at least one positive per row
    y = (jax.random.uniform(k2, (N, C)) < 0.25).astype(jnp.float32)
    y = y.at[:, 0].set(1.0)

    loss_fn = make_softmax_loss(pos_weight=pos_weight)
    loss = jax.block_until_ready(loss_fn(logit, y))

    ref = jax.block_until_ready(softmax_loss_ref(logit, y, pos_weight))
    assert jnp.allclose(loss, ref, rtol=1e-5, atol=1e-6), (loss, ref)

    print("KERNEL_OK")
</pallas_src>

<mosaic_0001>
module attributes {stable_mosaic.version = 11 : i64} {
  func.func @kernel(%arg0: i32, %arg1: memref<8x32xf32, #tpu.memory_space<vmem>>, %arg2: memref<8x32xf32, #tpu.memory_space<vmem>>, %arg3: memref<1x1x32xf32, #tpu.memory_space<vmem>>) attributes {dimension_semantics = [#tpu.dimension_semantics<parallel>], iteration_bounds = array<i64: 1>, scalar_prefetch = 0 : i64, scratch_operands = 0 : i64, tpu.core_type = #tpu.core_type<tc>, window_params = [{transform_indices = @transform_0, window_bounds = array<i64: 8, 32>}, {transform_indices = @transform_1, window_bounds = array<i64: 8, 32>}, {transform_indices = @transform_2, window_bounds = array<i64: 1, 1, 32>}]} {
    %c0 = arith.constant 0 : index
    %c0_0 = arith.constant 0 : index
    %0 = vector.load %arg1[%c0, %c0_0] : memref<8x32xf32, #tpu.memory_space<vmem>>, vector<8x32xf32>
    %c0_1 = arith.constant 0 : index
    %c0_2 = arith.constant 0 : index
    %1 = vector.load %arg2[%c0_1, %c0_2] : memref<8x32xf32, #tpu.memory_space<vmem>>, vector<8x32xf32>
    %cst = arith.constant dense<0.000000e+00> : vector<8xf32>
    %2 = vector.multi_reduction <add>, %1, %cst [1] : vector<8x32xf32> to vector<8xf32>
    %3 = vector.shape_cast %2 : vector<8xf32> to vector<8x1xf32>
    %cst_3 = arith.constant 1.000000e+00 : f32
    %4 = vector.broadcast %cst_3 : f32 to vector<8x1xf32>
    %5 = arith.divf %4, %3 : vector<8x1xf32>
    %6 = vector.broadcast %5 : vector<8x1xf32> to vector<8x32xf32>
    %7 = arith.mulf %1, %6 : vector<8x32xf32>
    %cst_4 = arith.constant dense<0xFF800000> : vector<8xf32>
    %8 = vector.multi_reduction <maximumf>, %0, %cst_4 [1] : vector<8x32xf32> to vector<8xf32>
    %9 = vector.shape_cast %8 : vector<8xf32> to vector<8x1xf32>
    %10 = vector.broadcast %9 : vector<8x1xf32> to vector<8x32xf32>
    %11 = arith.subf %0, %10 : vector<8x32xf32>
    %12 = math.exp %11 : vector<8x32xf32>
    %cst_5 = arith.constant dense<0.000000e+00> : vector<8xf32>
    %13 = vector.multi_reduction <add>, %12, %cst_5 [1] : vector<8x32xf32> to vector<8xf32>
    %14 = vector.shape_cast %13 : vector<8xf32> to vector<8x1xf32>
    %cst_6 = arith.constant 1.000000e+00 : f32
    %15 = vector.broadcast %cst_6 : f32 to vector<8x1xf32>
    %16 = arith.divf %15, %14 : vector<8x1xf32>
    %17 = vector.broadcast %16 : vector<8x1xf32> to vector<8x32xf32>
    %18 = arith.mulf %12, %17 : vector<8x32xf32>
    %cst_7 = arith.constant 9.99999993E-9 : f32
    %19 = vector.broadcast %cst_7 : f32 to vector<8x32xf32>
    %20 = arith.addf %18, %19 : vector<8x32xf32>
    %cst_8 = arith.constant 0.999999701 : f32
    %21 = vector.broadcast %cst_8 : f32 to vector<8x32xf32>
    %22 = arith.mulf %20, %21 : vector<8x32xf32>
    %cst_9 = arith.constant 1.000000e+00 : f32
    %23 = vector.broadcast %cst_9 : f32 to vector<8x32xf32>
    %24 = arith.mulf %23, %7 : vector<8x32xf32>
    %25 = math.log %22 : vector<8x32xf32>
    %26 = arith.mulf %24, %25 : vector<8x32xf32>
    %cst_10 = arith.constant 1.000000e+00 : f32
    %27 = vector.broadcast %cst_10 : f32 to vector<8x32xf32>
    %28 = arith.subf %27, %7 : vector<8x32xf32>
    %cst_11 = arith.constant 1.000000e+00 : f32
    %29 = vector.broadcast %cst_11 : f32 to vector<8x32xf32>
    %30 = arith.subf %29, %22 : vector<8x32xf32>
    %31 = math.log %30 : vector<8x32xf32>
    %32 = arith.mulf %28, %31 : vector<8x32xf32>
    %33 = arith.addf %26, %32 : vector<8x32xf32>
    %cst_12 = arith.constant 0.000000e+00 : f32
    %34 = vector.broadcast %cst_12 : f32 to vector<8x32xf32>
    %35 = arith.subf %34, %33 : vector<8x32xf32>
    %cst_13 = arith.constant dense<0.000000e+00> : vector<32xf32>
    %36 = vector.multi_reduction <add>, %35, %cst_13 [0] : vector<8x32xf32> to vector<32xf32>
    %37 = vector.shape_cast %36 : vector<32xf32> to vector<1x32xf32>
    %38 = vector.shape_cast %37 : vector<1x32xf32> to vector<1x1x32xf32>
    %c0_14 = arith.constant 0 : index
    %c0_15 = arith.constant 0 : index
    %c0_16 = arith.constant 0 : index
    %39 = vector.load %arg3[%c0_14, %c0_15, %c0_16] : memref<1x1x32xf32, #tpu.memory_space<vmem>>, vector<1x1x32xf32>
    tpu.vector_store %arg3[%c0_14, %c0_15, %c0_16], %38 {strides = array<i32>} : memref<1x1x32xf32, #tpu.memory_space<vmem>>, vector<1x1x32xf32>,
    return
  }
  func.func @transform_0(%arg0: i32) -> (i32, i32) {
    %c0_i32 = arith.constant 0 : i32
    %c0_i32_0 = arith.constant 0 : i32
    return %arg0, %c0_i32 : i32, i32
  }
  func.func @transform_1(%arg0: i32) -> (i32, i32) {
    %c0_i32 = arith.constant 0 : i32
    %c0_i32_0 = arith.constant 0 : i32
    return %arg0, %c0_i32 : i32, i32
  }
  func.func @transform_2(%arg0: i32) -> (i32, i32, i32) {
    %c0_i32 = arith.constant 0 : i32
    %c0_i32_0 = arith.constant 0 : i32
    %c0_i32_1 = arith.constant 0 : i32
    return %arg0, %c0_i32, %c0_i32_0 : i32, i32, i32
  }
}

</mosaic_0001>

<llo_original>
// kernel: tpu_custom_call.1
$region0: #{tpu_custom_call.1}
  #allocation0 [shape = 'u32[]', space=smem, size = 0x4, offset = 0x4, fixed_abs, tag = 'smem constant byte address 0x4 - core index']
  #allocation1 [shape = 'u32[72,128]{1,0:T(1,128)}', space=vmem, size = 0x9000, scoped, tag = 'internal scratch']
  %s0 = inlined_call_operand.hbm [shape: f32[8,32], index: 0, kind: input, shape index: {}]
  %s1 = inlined_call_operand.hbm [shape: f32[8,32], index: 1, kind: input, shape index: {}]
  %s2 = inlined_call_operand.hbm [shape: f32[1,1,32], index: 2, kind: output, shape index: {}]
  %s3 = sld [smem:[#allocation0]]
  $region26: #{tpu_custom_call.1} parent=0
    _
  %s5 = ssub.s32 1, %s3
  %s6 = scalar_select 0, %s5, %s3
  $region1: #{tpu_custom_call.1} parent=0
    #allocation2 [shape = 'u8[4096]{0}', space=vmem, size = 0x1000, scoped, tag = 'input window, operand 0, single buffered']
    #allocation3 [shape = 's32[1]{0}', space=sflag, size = 0x4, scoped, tag = 'scoped memory for tpu_custom_call.1']
    #allocation4 [shape = 's32[1]{0}', space=sflag, size = 0x4, scoped, tag = 'scoped memory for tpu_custom_call.1']
    #allocation5 [shape = 'u8[4096]{0}', space=vmem, size = 0x1000, scoped, tag = 'input window, operand 1, single buffered']
    #allocation6 [shape = 's32[1]{0}', space=sflag, size = 0x4, scoped, tag = 'scoped memory for tpu_custom_call.1']
    #allocation7 [shape = 'u8[512]{0}', space=vmem, size = 0x400, scoped, tag = 'output window, operand 0, single buffered']
    %7 = vsyncpa [#allocation3], 0
    %8 = vsyncpa [#allocation6], 0
    %9 = vsyncpa [#allocation4], 0
    // Predicated region
    $region2: #{tpu_custom_call.1} parent=1 // pred_check
      _
    $region3: #{tpu_custom_call.1} parent=1 // pred_check_branch
      %11 = sbr.rel (0) target = $region5
    $region4: #{tpu_custom_call.1} parent=1 // pred_region
      %13 = vsyncadd [#allocation3], 0
      %s15 = sshll.u32 %s0, 4
      %s16 = int_to_ptr.hbm [resolvable:$true] %s15
      %s17 = sshll.u32 [#allocation2], 4
      %s18 = int_to_ptr.vmem [resolvable:$true] %s17
      %20 = dma.hbm_to_vmem [thread:$0]  %s16, 128, %s18, [#allocation3]
    $region5: #{tpu_custom_call.1} parent=1 // pred_fallthru
      _
    // Predicated region
    $region6: #{tpu_custom_call.1} parent=1 // pred_check
      _
    $region7: #{tpu_custom_call.1} parent=1 // pred_check_branch
      %22 = sbr.rel (0) target = $region9
    $region8: #{tpu_custom_call.1} parent=1 // pred_region
      %24 = vsyncadd [#allocation6], 0
      %s26 = sshll.u32 %s1, 4
      %s27 = int_to_ptr.hbm [resolvable:$true] %s26
      %s28 = sshll.u32 [#allocation5], 4
      %s29 = int_to_ptr.vmem [resolvable:$true] %s28
      %31 = dma.hbm_to_vmem [thread:$0]  %s27, 128, %s29, [#allocation6]
    $region9: #{tpu_custom_call.1} parent=1 // pred_fallthru
      _
    // Predicated region
    $region10: #{tpu_custom_call.1} parent=1 // pred_check
      _
    $region11: #{tpu_custom_call.1} parent=1 // pred_check_branch
      %33 = sbr.rel (0) target = $region13
    $region12: #{tpu_custom_call.1} parent=1 // pred_region
      %35 = dma.done [#allocation3], 128
    $region13: #{tpu_custom_call.1} parent=1 // pred_fallthru
      _
    // Predicated region
    $region14: #{tpu_custom_call.1} parent=1 // pred_check
      _
    $region15: #{tpu_custom_call.1} parent=1 // pred_check_branch
      %37 = sbr.rel (0) target = $region17
    $region16: #{tpu_custom_call.1} parent=1 // pred_region
      %39 = dma.done [#allocation6], 128
    $region17: #{tpu_custom_call.1} parent=1 // pred_fallthru
      _
    %v40 = vld [vmem:[#allocation2] sm:$0xff]
    %v41 = vld [vmem:[#allocation5] sm:$0xff]
    %vm42 = vcmask 261120
    %v43 = vsel %vm42, %v41, 0.0
    %44 = vadd.xlane.f32.xlu0 %v43
    %v45 = vpop.xlane.xlu0 %44
    %v46 = vrcp.pop %v45
    %v47 = vmul.f32 %v45, %v46
    %v48 = vsub.f32 1.0, %v47
    %v49 = vmul.f32 %v46, %v48
    %v50 = vadd.f32 %v46, %v49
    %vm51 = vweird.f32 %v45
    %vm52 = vweird.f32 %v46
    %vm53 = vmor %vm51, %vm52
    %v54 = vsel %vm53, %v46, %v50
    %v55 = vand.u32 2147483647, %v45
    %vm56 = vcmp.eq.f32.partialorder %v55, 8.507059e+37
    %v57 = vand.u32 %v45, 2147483648
    %v58 = vor.u32 1.1754944e-38, %v57
    %v59 = vsel %vm56, %v58, %v54
    %v60 = vmul.f32 1.0, %v59
    %v61 = vmul.f32 %v41, %v60
    %v62 = vsel %vm42, %v40, -inf
    %63 = vmax.xlane.f32.xlu0 %v62
    %v64 = vpop.xlane.xlu0 %63
    %v65 = vsub.f32 %v40, %v64
    %v66 = vmul.f32 %v65, 1.442695
    %v67 = vpow.pop %v66
    %v68 = vsel %vm42, %v67, 0.0
    %69 = vadd.xlane.f32.xlu0 %v68
    %v70 = vpop.xlane.xlu0 %69
    %v71 = vrcp.pop %v70
    %v72 = vmul.f32 %v70, %v71
    %v73 = vsub.f32 1.0, %v72
    %v74 = vmul.f32 %v71, %v73
    %v75 = vadd.f32 %v71, %v74
    %vm76 = vweird.f32 %v70
    %vm77 = vweird.f32 %v71
    %vm78 = vmor %vm76, %vm77
    %v79 = vsel %vm78, %v71, %v75
    %v80 = vand.u32 2147483647, %v70
    %vm81 = vcmp.eq.f32.partialorder %v80, 8.507059e+37
    %v82 = vand.u32 %v70, 2147483648
    %v83 = vor.u32 1.1754944e-38, %v82
    %v84 = vsel %vm81, %v83, %v79
    %v85 = vmul.f32 1.0, %v84
    %v86 = vmul.f32 %v67, %v85
    %v87 = vadd.f32 %v86, 1e-08
    %v88 = vmul.f32 %v87, 0.9999997
    %v89 = vlog2.pop %v88
    %v90 = vmul.f32 %v89, 0.6931472
    %v91 = vmul.f32 %v61, %v90
    %v92 = vsub.f32 1.0, %v61
    %v93 = vsub.f32 1.0, %v88
    %v94 = vlog2.pop %v93
    %v95 = vmul.f32 %v94, 0.6931472
    %v96 = vmul.f32 %v92, %v95
    %v97 = vadd.f32 %v91, %v96
    %v98 = vsub.f32 0.0, %v97
    %v99 = vsel %vm42, %v98, 0.0
    %v100 = vrot.slane %v99, 4
    %v101 = vadd.f32 %v99, %v100
    %v102 = vrot.slane %v101, 2
    %v103 = vadd.f32 %v101, %v102
    %v104 = vrot.slane %v103, 1
    %v105 = vadd.f32 %v103, %v104
    %vm106 = vcmask 253952
    %107 = vst.msk [vmem:[#allocation7] sm:$0x1] %vm106, %v105
    // Predicated region
    $region18: #{tpu_custom_call.1} parent=1 // pred_check
      _
    $region19: #{tpu_custom_call.1} parent=1 // pred_check_branch
      %109 = sbr.rel (0) target = $region21
    $region20: #{tpu_custom_call.1} parent=1 // pred_region
      %111 = vsyncadd [#allocation4], 0
      %s113 = sshll.u32 [#allocation7], 4
      %s114 = int_to_ptr.vmem [resolvable:$true] %s113
      %s115 = sshll.u32 %s2, 4
      %s116 = int_to_ptr.hbm [resolvable:$true] %s115
      %118 = dma.vmem_to_hbm [thread:$0]  %s114, 16, %s116, [#allocation4]
    $region21: #{tpu_custom_call.1} parent=1 // pred_fallthru
      _
    // Predicated region
    $region22: #{tpu_custom_call.1} parent=1 // pred_check
      _
    $region23: #{tpu_custom_call.1} parent=1 // pred_check_branch
      %120 = sbr.rel (0) target = $region25
    $region24: #{tpu_custom_call.1} parent=1 // pred_region
      %122 = dma.done [#allocation4], 16
    $region25: #{tpu_custom_call.1} parent=1 // pred_fallthru
      _
    %123 = vsyncpa [#allocation3], 1
    %124 = vsyncpa [#allocation6], 1
    %125 = vsyncpa [#allocation4], 1

</llo_original>
